<compile_context>
chip_gen: v6e
topology: v6e:2x2x1
jax: 0.10.0
libtpu: 0.0.40
codegen_flags: <defaults>
</compile_context>

<pallas_src>
import functools

import jax
import jax.numpy as jnp
from jax.experimental import pallas as pl
from jax.experimental.pallas import tpu as pltpu

_MASK = -1e9  # additive mask value for non-edges (matches the reference fill value)


def _round_up(x, m):
    return (x + m - 1) // m * m


def _pad2(a, rows, cols):
    r, c = a.shape
    return jnp.pad(a, ((0, rows - r), (0, cols - c)))


# ---------------------------------------------------------------------------
# Kernels: one row-tile of masked attention softmax + aggregation
# ---------------------------------------------------------------------------
def _attn_tile(wh_ref, src_ref, dst_ref, bias_ref, slope):
    """Row softmax over masked attention logits + attn @ Wh for one tile of rows."""
    e = src_ref[...] + dst_ref[...]                      # [TM,1]+[1,Np] -> [TM,Np]
    e = jnp.where(e > 0, e, slope * e)                   # LeakyReLU(slope)
    e = e + bias_ref[...].astype(jnp.float32)            # additive adjacency mask
    e = e - jnp.max(e, axis=1, keepdims=True)            # row softmax (dim=1)
    p = jnp.exp(e)
    # TODO(synk): on v6e/v7x the exp/multiply chain could run in bf16 (keeping the
    #             reductions in f32) for a VALU/EUP cut; kept f32 for attention fidelity.
    attn = p * pl.reciprocal(jnp.sum(p, axis=1, keepdims=True), approx=True)
    agg = jnp.dot(attn.astype(jnp.bfloat16), wh_ref[...],
                  preferred_element_type=jnp.float32)    # [TM, Fp] (MXU, f32 acc)
    return attn, agg


def _gat_tile_kernel(wh_ref, src_ref, dst_ref, bias_ref, attn_ref, out_ref, *, slope):
    attn, agg = _attn_tile(wh_ref, src_ref, dst_ref, bias_ref, slope)
    attn_ref[...] = attn.astype(attn_ref.dtype)
    out_ref[...] = agg


def _gat_tile_residual_kernel(wh_ref, src_ref, dst_ref, bias_ref, h_ref,
                              attn_ref, doc_ref, *, slope):
    attn, agg = _attn_tile(wh_ref, src_ref, dst_ref, bias_ref, slope)
    attn_ref[...] = attn.astype(attn_ref.dtype)
    doc_ref[...] = agg + h_ref[...]                      # document = document + words


# ---------------------------------------------------------------------------
# Generation-aware VMEM budgeting / tiling
# ---------------------------------------------------------------------------
def _vmem_capacity_bytes():
    try:
        return int(pltpu.get_tpu_info().vmem_capacity_bytes)
    except Exception:                      # conservative fallback (v7x-sized)
        return 64 * 2**20


def _vmem_estimate(n_pad, fp, tm, attn_bytes, with_residual):
    resident = 2 * (n_pad * fp * 2 + n_pad * 4)          # Wh (bf16) + dst row, x2 bufs
    per_tile = tm * n_pad * (2 + attn_bytes)             # bias in + attn out
    per_tile += tm * 4 + tm * fp * 4                     # src in + agg/doc out
    if with_residual:
        per_tile += tm * fp * 4                          # layer-1 rows (residual input)
    streamed = 2 * per_tile                              # double buffered
    interm = 2 * tm * n_pad * 4                          # f32 softmax intermediates
    return resident + streamed + interm


def _vmem_limit(estimate, vmem_cap):
    return int(min(int(vmem_cap * 0.85), max(32 * 2**20, int(estimate * 1.5))))


def _choose_row_tile(n_pad, fp, attn_bytes, vmem_cap, requested=None):
    if requested is not None:
        tm = int(requested)
        if n_pad % tm != 0 or tm % 8 != 0:
            raise ValueError(
                f"row_tile={tm} must divide padded N={n_pad} and be a multiple of 8")
        return tm
    budget = int(vmem_cap * 0.45)
    tm = min(128, n_pad)                                 # n_pad >= 128 by construction
    for cand in range(256, min(n_pad, 1024) + 1, 128):
        if n_pad % cand == 0 and \
                _vmem_estimate(n_pad, fp, cand, attn_bytes, True) <= budget:
            tm = cand
    return tm


def _gat_cost(n_pad, fp, attn_bytes):
    flops = 2 * n_pad * n_pad * fp + 10 * n_pad * n_pad
    byts = n_pad * n_pad * (2 + attn_bytes) + n_pad * fp * 10 + n_pad * 8
    return pl.CostEstimate(flops=int(flops), transcendentals=int(n_pad * n_pad),
                           bytes_accessed=int(byts))


# ---------------------------------------------------------------------------
# Wrapper
# ---------------------------------------------------------------------------
def article2graph_forward(in_doc, adjs, params, *, slope=0.01, row_tile=None,
                          attn_dtype=jnp.float32):
    """JAX/Pallas equivalent of Article2Graph.forward.

    in_doc: int token ids [N]; adjs: (adj_words [N,N], adj_doc [N,N]).
    Returns (docMean [wFeat], sattention [N,N], dattention [N,N], label [labels]).
    """
    n = int(in_doc.shape[0])
    if n == 0:                 # mirrors `if words.size()[0] != 0: ... else: return`
        return None

    emb = params["emb"].astype(jnp.float32)
    w1, a1s, a1d = (params[k].astype(jnp.float32) for k in ("W1", "a1_src", "a1_dst"))
    w2, a2s, a2d = (params[k].astype(jnp.float32) for k in ("W2", "a2_src", "a2_dst"))
    cw, cb = params["Cw"].astype(jnp.float32), params["Cb"].astype(jnp.float32)

    edim = emb.shape[1]
    wfeat = w1.shape[1]
    labels = cw.shape[1]
    fp = _round_up(wfeat, 128)              # lane-dense node features
    n_pad = _round_up(n, 128)               # lane-dense attention rows/cols

    vmem_cap = _vmem_capacity_bytes()
    attn_bytes = jnp.dtype(attn_dtype).itemsize
    tm = _choose_row_tile(n_pad, fp, attn_bytes, vmem_cap, row_tile)
    nt = n_pad // tm
    grid = (nt,)
    semantics = ("parallel",)               # tiles are independent -> use both v7x TCs

    # TODO(synk): embedding gather stays as an XLA gather in the wrapper; an in-kernel
    # gather (scalar prefetch + pl.Element row BlockSpec) is possible but not worth it.
    words = jnp.take(emb, in_doc.astype(jnp.int32), axis=0)            # [N, edim]
    words_p = _pad2(words, n_pad, edim)                                # zero pad rows

    # Additive adjacency masks in bf16: 0 where adj>0 else -1e9; padding is -1e9.
    # NOTE: fully isolated rows (all-zero adjacency) yield a near-uniform softmax,
    # matching the reference's masked_fill(-1e9) behaviour up to the leaky term.
    def make_bias(adj):
        core = jnp.where(adj > 0, 0.0, _MASK).astype(jnp.bfloat16)
        full = jnp.full((n_pad, n_pad), _MASK, dtype=jnp.bfloat16)
        return full.at[:n, :n].set(core)

    bias_w = make_bias(adjs[0])
    bias_d = make_bias(adjs[1])

    def prologue(x, w, a_src, a_dst):
        """Per-layer O(N*F^2) prep in XLA: Wh + source/destination attention scores."""
        wh = x @ w                                       # [N_pad, F] f32
        src = wh @ a_src                                 # [N_pad, 1]
        dst = (wh @ a_dst).T                             # [1, N_pad]
        return _pad2(wh, n_pad, fp).astype(jnp.bfloat16), src, dst

    def attn_specs(with_residual):
        specs = [
            pl.BlockSpec((n_pad, fp), lambda i: (0, 0)),   # Wh (resident, bf16)
            pl.BlockSpec((tm, 1), lambda i: (i, 0)),       # src scores (streamed rows)
            pl.BlockSpec((1, n_pad), lambda i: (0, 0)),    # dst scores (resident row)
            pl.BlockSpec((tm, n_pad), lambda i: (i, 0)),   # additive bias (bf16 rows)
        ]
        if with_residual:
            specs.append(pl.BlockSpec((tm, fp), lambda i: (i, 0)))   # layer-1 rows
        return specs

    # ---- layer 1: sEncoder(words, adjs[0]) -------------------------------------
    wh1, src1, dst1 = prologue(words_p, w1, a1s, a1d)
    est1 = _vmem_estimate(n_pad, fp, tm, attn_bytes, with_residual=False)
    sattn_p, h1 = pl.pallas_call(
        functools.partial(_gat_tile_kernel, slope=slope),
        out_shape=(jax.ShapeDtypeStruct((n_pad, n_pad), attn_dtype),  # sattention
                   jax.ShapeDtypeStruct((n_pad, fp), jnp.float32)),   # layer-1 rows
        grid=grid,
        in_specs=attn_specs(with_residual=False),
        out_specs=(pl.BlockSpec((tm, n_pad), lambda i: (i, 0)),
                   pl.BlockSpec((tm, fp), lambda i: (i, 0))),
        compiler_params=pltpu.CompilerParams(
            dimension_semantics=semantics,
            vmem_limit_bytes=_vmem_limit(est1, vmem_cap)),
        cost_estimate=_gat_cost(n_pad, fp, attn_bytes),
    )(wh1, src1, dst1, bias_w)

    # Padded rows see an all-masked softmax and come out non-zero; zero them before
    # they feed the layer-2 scores and the residual.
    row_valid = (jnp.arange(n_pad) < n)[:, None]
    h1 = jnp.where(row_valid, h1, 0.0)

    # ---- layer 2: dEncoder(h1, adjs[1]) fused with the residual -----------------
    wh2, src2, dst2 = prologue(h1[:, :wfeat], w2, a2s, a2d)
    est2 = _vmem_estimate(n_pad, fp, tm, attn_bytes, with_residual=True)
    dattn_p, doc = pl.pallas_call(
        functools.partial(_gat_tile_residual_kernel, slope=slope),
        out_shape=(jax.ShapeDtypeStruct((n_pad, n_pad), attn_dtype),  # dattention
                   jax.ShapeDtypeStruct((n_pad, fp), jnp.float32)),   # document rows
        grid=grid,
        in_specs=attn_specs(with_residual=True),
        out_specs=(pl.BlockSpec((tm, n_pad), lambda i: (i, 0)),
                   pl.BlockSpec((tm, fp), lambda i: (i, 0))),
        compiler_params=pltpu.CompilerParams(
            dimension_semantics=semantics,
            vmem_limit_bytes=_vmem_limit(est2, vmem_cap)),
        cost_estimate=_gat_cost(n_pad, fp, attn_bytes),
    )(wh2, src2, dst2, bias_d, h1)

    # ---- epilogue in XLA (O(F)): mean pool, classifier, label softmax -----------
    doc_mean = jnp.mean(doc[:n, :wfeat], axis=0)                      # [wFeat]
    logits = doc_mean @ cw + cb.reshape(-1)
    label = jax.nn.softmax(logits)

    return doc_mean, sattn_p[:n, :n], dattn_p[:n, :n], label


# ---------------------------------------------------------------------------
# Parameters, pure-JAX reference, and demo
# ---------------------------------------------------------------------------
def init_params(key, vocab, edim, wfeat, labels=2):
    ks = jax.random.split(key, 8)
    s = 0.1
    return {
        "emb":    jax.random.normal(ks[0], (vocab, edim), jnp.float32),
        "W1":     jax.random.normal(ks[1], (edim, wfeat), jnp.float32) * s,
        "a1_src": jax.random.normal(ks[2], (wfeat, 1), jnp.float32) * s,
        "a1_dst": jax.random.normal(ks[3], (wfeat, 1), jnp.float32) * s,
        "W2":     jax.random.normal(ks[4], (wfeat, wfeat), jnp.float32) * s,
        "a2_src": jax.random.normal(ks[5], (wfeat, 1), jnp.float32) * s,
        "a2_dst": jax.random.normal(ks[6], (wfeat, 1), jnp.float32) * s,
        "Cw":     jax.random.normal(ks[7], (wfeat, labels), jnp.float32) * s,
        "Cb":     jnp.zeros((1, labels), jnp.float32),
    }


def _reference_forward(in_doc, adjs, params, slope=0.01):
    words = jnp.take(params["emb"], in_doc, axis=0)

    def gat(h, adj, w, a_s, a_d):
        wh = h @ w
        e = wh @ a_s + (wh @ a_d).T
        e = jnp.where(e > 0, e, slope * e)
        e = jnp.where(adj > 0, e, _MASK)
        attn = jax.nn.softmax(e, axis=1)
        return attn @ wh, attn

    h1, sattn = gat(words, adjs[0], params["W1"], params["a1_src"], params["a1_dst"])
    doc, dattn = gat(h1, adjs[1], params["W2"], params["a2_src"], params["a2_dst"])
    doc = doc + h1
    doc_mean = jnp.mean(doc, axis=0)
    label = jax.nn.softmax(doc_mean @ params["Cw"] + params["Cb"][0])
    return doc_mean, sattn, dattn, label


if __name__ == "__main__":
    key = jax.random.PRNGKey(0)
    k_tok, k_a1, k_a2, k_p = jax.random.split(key, 4)

    N, vocab, edim, wFeat, labels = 200, 100, 16, 32, 3
    in_doc = jax.random.randint(k_tok, (N,), 0, vocab, dtype=jnp.int32)

    def rand_adj(k):
        a = (jax.random.uniform(k, (N, N)) > 0.6).astype(jnp.float32)
        a = jnp.maximum(a, a.T)
        return jnp.maximum(a, jnp.eye(N, dtype=jnp.float32))   # self links

    adjs = (rand_adj(k_a1), rand_adj(k_a2))
    params = init_params(k_p, vocab, edim, wFeat, labels)

    # N=200 -> padded to 256; row_tile=128 gives a 2-step grid (exercises streaming,
    # the pad-row/pad-column handling and the lane-dense 256-wide attention stores).
    doc_mean, sattn, dattn, label = article2graph_forward(
        in_doc, adjs, params, slope=0.01, row_tile=128)
    jax.block_until_ready((doc_mean, sattn, dattn, label))

    assert doc_mean.shape == (wFeat,)
    assert sattn.shape == (N, N) and dattn.shape == (N, N)
    assert label.shape == (labels,)
    # softmax structure (approx reciprocal -> tolerance a bit looser than exact)
    assert bool(jnp.allclose(jnp.sum(sattn, axis=1), 1.0, atol=5e-3))
    assert bool(jnp.allclose(jnp.sum(dattn, axis=1), 1.0, atol=5e-3))
    assert bool(jnp.allclose(jnp.sum(label), 1.0, atol=1e-5))

    # compare against the pure-JAX f32 reference (bf16 MXU + approx rcp -> loose tol)
    r_mean, r_sattn, r_dattn, r_label = _reference_forward(in_doc, adjs, params)
    assert bool(jnp.allclose(sattn, r_sattn, atol=2e-3))
    assert bool(jnp.allclose(dattn, r_dattn, atol=2e-2))
    assert bool(jnp.allclose(doc_mean, r_mean, atol=5e-2, rtol=5e-2))
    assert bool(jnp.allclose(label, r_label, atol=2e-2))

    print("KERNEL_OK")
</pallas_src>

<mosaic_0001>
module attributes {stable_mosaic.version = 11 : i64} {
  func.func @_gat_tile_kernel(%arg0: i32, %arg1: memref<256x128xbf16, #tpu.memory_space<vmem>>, %arg2: memref<128x1xf32, #tpu.memory_space<vmem>>, %arg3: memref<1x256xf32, #tpu.memory_space<vmem>>, %arg4: memref<128x256xbf16, #tpu.memory_space<vmem>>, %arg5: memref<128x256xf32, #tpu.memory_space<vmem>>, %arg6: memref<128x128xf32, #tpu.memory_space<vmem>>) attributes {dimension_semantics = [#tpu.dimension_semantics<parallel>], iteration_bounds = array<i64: 2>, scalar_prefetch = 0 : i64, scratch_operands = 0 : i64, tpu.core_type = #tpu.core_type<tc>, window_params = [{pipeline_mode = #tpu.pipeline_mode<synchronous>, transform_indices = @transform_0, window_bounds = array<i64: 256, 128>}, {transform_indices = @transform_1, window_bounds = array<i64: 128, 1>}, {pipeline_mode = #tpu.pipeline_mode<synchronous>, transform_indices = @transform_2, window_bounds = array<i64: 1, 256>}, {transform_indices = @transform_3, window_bounds = array<i64: 128, 256>}, {transform_indices = @transform_4, window_bounds = array<i64: 128, 256>}, {transform_indices = @transform_5, window_bounds = array<i64: 128, 128>}]} {
    %c0 = arith.constant 0 : index
    %c0_0 = arith.constant 0 : index
    %0 = vector.load %arg2[%c0, %c0_0] : memref<128x1xf32, #tpu.memory_space<vmem>>, vector<128x1xf32>
    %c0_1 = arith.constant 0 : index
    %c0_2 = arith.constant 0 : index
    %1 = vector.load %arg3[%c0_1, %c0_2] : memref<1x256xf32, #tpu.memory_space<vmem>>, vector<1x256xf32>
    %2 = vector.broadcast %0 : vector<128x1xf32> to vector<128x256xf32>
    %3 = vector.broadcast %1 : vector<1x256xf32> to vector<128x256xf32>
    %4 = arith.addf %2, %3 : vector<128x256xf32>
    %cst = arith.constant 0.000000e+00 : f32
    %5 = vector.broadcast %cst : f32 to vector<128x256xf32>
    %6 = arith.cmpf ogt, %4, %5 : vector<128x256xf32>
    %cst_3 = arith.constant 0.00999999977 : f32
    %7 = vector.broadcast %cst_3 : f32 to vector<128x256xf32>
    %8 = arith.mulf %7, %4 : vector<128x256xf32>
    %9 = arith.select %6, %4, %8 : vector<128x256xi1>, vector<128x256xf32>
    %c0_4 = arith.constant 0 : index
    %c0_5 = arith.constant 0 : index
    %10 = vector.load %arg4[%c0_4, %c0_5] : memref<128x256xbf16, #tpu.memory_space<vmem>>, vector<128x256xbf16>
    %11 = arith.extf %10 : vector<128x256xbf16> to vector<128x256xf32>
    %12 = arith.addf %9, %11 : vector<128x256xf32>
    %cst_6 = arith.constant dense<0xFF800000> : vector<128xf32>
    %13 = vector.multi_reduction <maximumf>, %12, %cst_6 [1] : vector<128x256xf32> to vector<128xf32>
    %14 = vector.shape_cast %13 : vector<128xf32> to vector<128x1xf32>
    %15 = vector.broadcast %14 : vector<128x1xf32> to vector<128x256xf32>
    %16 = arith.subf %12, %15 : vector<128x256xf32>
    %17 = math.exp %16 : vector<128x256xf32>
    %cst_7 = arith.constant dense<0.000000e+00> : vector<128xf32>
    %18 = vector.multi_reduction <add>, %17, %cst_7 [1] : vector<128x256xf32> to vector<128xf32>
    %19 = vector.shape_cast %18 : vector<128xf32> to vector<128x1xf32>
    %20 = tpu.reciprocal %19 {approx = true} : vector<128x1xf32> -> vector<128x1xf32>
    %21 = vector.broadcast %20 : vector<128x1xf32> to vector<128x256xf32>
    %22 = arith.mulf %17, %21 : vector<128x256xf32>
    %23 = arith.truncf %22 : vector<128x256xf32> to vector<128x256xbf16>
    %c0_8 = arith.constant 0 : index
    %c0_9 = arith.constant 0 : index
    %24 = vector.load %arg1[%c0_8, %c0_9] : memref<256x128xbf16, #tpu.memory_space<vmem>>, vector<256x128xbf16>
    %cst_10 = arith.constant dense<0.000000e+00> : vector<128x128xf32>
    %25 = tpu.matmul %23, %24, %cst_10 {dimension_numbers = #tpu.dot_dimension_numbers<[1], [0], [0], [1], [0, 0, 1, 1], [], []>} : vector<128x256xbf16>, vector<256x128xbf16>, vector<128x128xf32> -> vector<128x128xf32>
    %c0_11 = arith.constant 0 : index
    %c0_12 = arith.constant 0 : index
    %26 = vector.load %arg5[%c0_11, %c0_12] : memref<128x256xf32, #tpu.memory_space<vmem>>, vector<128x256xf32>
    tpu.vector_store %arg5[%c0_11, %c0_12], %22 {strides = array<i32>} : memref<128x256xf32, #tpu.memory_space<vmem>>, vector<128x256xf32>,
    %c0_13 = arith.constant 0 : index
    %c0_14 = arith.constant 0 : index
    %27 = vector.load %arg6[%c0_13, %c0_14] : memref<128x128xf32, #tpu.memory_space<vmem>>, vector<128x128xf32>
    tpu.vector_store %arg6[%c0_13, %c0_14], %25 {strides = array<i32>} : memref<128x128xf32, #tpu.memory_space<vmem>>, vector<128x128xf32>,
    return
  }
  func.func @transform_0(%arg0: i32) -> (i32, i32) {
    %c0_i32 = arith.constant 0 : i32
    %c0_i32_0 = arith.constant 0 : i32
    %c0_i32_1 = arith.constant 0 : i32
    return %c0_i32, %c0_i32_0 : i32, i32
  }
  func.func @transform_1(%arg0: i32) -> (i32, i32) {
    %c0_i32 = arith.constant 0 : i32
    %c0_i32_0 = arith.constant 0 : i32
    return %arg0, %c0_i32 : i32, i32
  }
  func.func @transform_2(%arg0: i32) -> (i32, i32) {
    %c0_i32 = arith.constant 0 : i32
    %c0_i32_0 = arith.constant 0 : i32
    %c0_i32_1 = arith.constant 0 : i32
    return %c0_i32, %c0_i32_0 : i32, i32
  }
  func.func @transform_3(%arg0: i32) -> (i32, i32) {
    %c0_i32 = arith.constant 0 : i32
    %c0_i32_0 = arith.constant 0 : i32
    return %arg0, %c0_i32 : i32, i32
  }
  func.func @transform_4(%arg0: i32) -> (i32, i32) {
    %c0_i32 = arith.constant 0 : i32
    %c0_i32_0 = arith.constant 0 : i32
    return %arg0, %c0_i32 : i32, i32
  }
  func.func @transform_5(%arg0: i32) -> (i32, i32) {
    %c0_i32 = arith.constant 0 : i32
    %c0_i32_0 = arith.constant 0 : i32
    return %arg0, %c0_i32 : i32, i32
  }
}

</mosaic_0001>

<llo_original>
// kernel: tpu_custom_call.1
$region0: #{tpu_custom_call.1}
  #allocation0 [shape = 'u32[]', space=smem, size = 0x4, offset = 0x4, fixed_abs, tag = 'smem constant byte address 0x4 - core index']
  #allocation1 [shape = 'u32[144,128]{1,0:T(1,128)}', space=vmem, size = 0x12000, scoped, tag = 'internal scratch']
  %s0 = inlined_call_operand.hbm [shape: bf16[256,128], index: 0, kind: input, shape index: {}]
  %s1 = inlined_call_operand.vmem [shape: f32[256,1], index: 1, kind: input, shape index: {}]
  %s2 = inlined_call_operand.vmem [shape: f32[1,256], index: 2, kind: input, shape index: {}]
  %s3 = inlined_call_operand.vmem [shape: bf16[256,256], index: 3, kind: input, shape index: {}]
  %s4 = inlined_call_operand.hbm [shape: f32[256,256], index: 4, kind: output, shape index: {0}]
  %s5 = inlined_call_operand.hbm [shape: f32[256,128], index: 5, kind: output, shape index: {1}]
  %6 = xla_tuple %s4, %s5
  %s7 = sld [smem:[#allocation0]]
  $region61: #{tpu_custom_call.1} parent=0
    _
  %s9 = ssub.s32 1, %s7
  %s10 = scalar_select 0, %s9, %s7
  $region1: #{tpu_custom_call.1} parent=0
    #allocation2 [shape = 'u8[65536]{0}', space=vmem, size = 0x10000, scoped, tag = 'input window, operand 0, single buffered']
    #allocation3 [shape = 's32[2]{0}', space=sflag, size = 0x8, scoped, tag = 'scoped memory for tpu_custom_call.1']
    #allocation4 [shape = 's32[2]{0}', space=sflag, size = 0x8, scoped, tag = 'scoped memory for tpu_custom_call.1']
    #allocation5 [shape = 'u8[262144]{0}', space=vmem, size = 0x40000, scoped, tag = 'output window, operand 0']
    #allocation6 [shape = 'u8[131072]{0}', space=vmem, size = 0x20000, scoped, tag = 'output window, operand 1']
    #allocation7 [shape = 's32[2]{0}', space=sflag, size = 0x8, scoped, tag = 'scoped memory for tpu_custom_call.1']
    %11 = vsyncpa [#allocation3], 0
    %12 = vsyncpa [#allocation4], 0
    %s13 = scalar_lea.sflag [#allocation4], 1
    %14 = vsyncpa %s13, 0
    %15 = vsyncpa [#allocation7], 0
    %s16 = scalar_lea.sflag [#allocation7], 1
    %17 = vsyncpa %s16, 0
    loop: start=0, step=1, limit=4
    $region2: #{tpu_custom_call.1} parent=1 // loop_pre_header
      _
    $region3: #{tpu_custom_call.1} parent=1 // loop_header
      %s19 = sphi 0, %s23
      %p20 = scmp.ge.s32.totalorder %s19, 4
      %s27 = sphi 0, %s27
      %s29 = sphi 0, %s27
      %s30 = sphi 0, %s29
      %s44 = sphi 0, %s30
      %s50 = sphi 0, %s52
      %s53 = sphi 0, %s50
      %s54 = sphi 0, %s53
      %s70 = sphi 0, %s54
      %s74 = sphi 0, %s74
      %s76 = sphi 0, %s74
      %s77 = sphi 0, %s76
      %s91 = sphi 0, %s77
      %s97 = sphi 0, %s99
      %s100 = sphi 0, %s97
      %s101 = sphi 0, %s100
      %s117 = sphi 0, %s101
      %s123 = sphi 0, %s125
      %s126 = sphi 0, %s123
      %s127 = sphi 0, %s126
      %s143 = sphi 0, %s127
      %s149 = sphi 0, %s151
      %s152 = sphi 0, %s149
      %s153 = sphi 0, %s152
      %s169 = sphi 0, %s153
    $region4: #{tpu_custom_call.1} parent=1 // loop_header_branch
      %22 = sbr.rel (%p20) target = $region8
    $region5: #{tpu_custom_call.1} parent=1 // loop_body
      %s24 = ssub.s32 %s19, 1
      %s25 = ssub.s32 %s19, 2
      %s26 = sadd.s32 %s19, 1
      %s28 = sadd.s32 %s27, 1
      %p31 = scmp.eq.s32.totalorder %s19, 1
      %p32 = scmp.ne.s32.totalorder %s27, %s29
      %p33 = scmp.eq.s32.totalorder %s19, 0
      %p34 = por %p32, %p33
      %p35 = scmp.ne.s32.totalorder %s27, %s29
      %p36 = scmp.eq.s32.totalorder %s24, 1
      %p37 = por %p35, %p36
      %p38 = scmp.ne.s32.totalorder %s29, %s30
      %p39 = scmp.eq.s32.totalorder %s24, 0
      %p40 = por %p38, %p39
      %p41 = scmp.ne.s32.totalorder %s29, %s30
      %p42 = scmp.eq.s32.totalorder %s25, 1
      %p43 = por %p41, %p42
      %p45 = scmp.ne.s32.totalorder %s30, %s44
      %p46 = scmp.eq.s32.totalorder %s25, 0
      %p47 = por %p45, %p46
      %s48 = ssub.s32 %s19, %s26
      %p49 = scmp.eq.s32.totalorder %s48, 0
      %s51 = sadd.s32 %s50, 1
      %s52 = scalar_select %p49, %s50, %s51
      %p55 = pneg %p49
      %p56 = scmp.eq.s32.totalorder %s19, 1
      %p57 = por %p55, %p56
      %p58 = scmp.ne.s32.totalorder %s50, %s53
      %p59 = scmp.eq.s32.totalorder %s19, 0
      %p60 = por %p58, %p59
      %p61 = scmp.ne.s32.totalorder %s50, %s53
      %p62 = scmp.eq.s32.totalorder %s24, 1
      %p63 = por %p61, %p62
      %p64 = scmp.ne.s32.totalorder %s53, %s54
      %p65 = scmp.eq.s32.totalorder %s24, 0
      %p66 = por %p64, %p65
      %p67 = scmp.ne.s32.totalorder %s53, %s54
      %p68 = scmp.eq.s32.totalorder %s25, 1
      %p69 = por %p67, %p68
      %p71 = scmp.ne.s32.totalorder %s54, %s70
      %p72 = scmp.eq.s32.totalorder %s25, 0
      %p73 = por %p71, %p72
      %s75 = sadd.s32 %s74, 1
      %p78 = scmp.eq.s32.totalorder %s19, 1
      %p79 = scmp.ne.s32.totalorder %s74, %s76
      %p80 = scmp.eq.s32.totalorder %s19, 0
      %p81 = por %p79, %p80
      %p82 = scmp.ne.s32.totalorder %s74, %s76
      %p83 = scmp.eq.s32.totalorder %s24, 1
      %p84 = por %p82, %p83
      %p85 = scmp.ne.s32.totalorder %s76, %s77
      %p86 = scmp.eq.s32.totalorder %s24, 0
      %p87 = por %p85, %p86
      %p88 = scmp.ne.s32.totalorder %s76, %s77
      %p89 = scmp.eq.s32.totalorder %s25, 1
      %p90 = por %p88, %p89
      %p92 = scmp.ne.s32.totalorder %s77, %s91
      %p93 = scmp.eq.s32.totalorder %s25, 0
      %p94 = por %p92, %p93
      %s95 = ssub.s32 %s19, %s26
      %p96 = scmp.eq.s32.totalorder %s95, 0
      %s98 = sadd.s32 %s97, 1
      %s99 = scalar_select %p96, %s97, %s98
      %p102 = pneg %p96
      %p103 = scmp.eq.s32.totalorder %s19, 1
      %p104 = por %p102, %p103
      %p105 = scmp.ne.s32.totalorder %s97, %s100
      %p106 = scmp.eq.s32.totalorder %s19, 0
      %p107 = por %p105, %p106
      %p108 = scmp.ne.s32.totalorder %s97, %s100
      %p109 = scmp.eq.s32.totalorder %s24, 1
      %p110 = por %p108, %p109
      %p111 = scmp.ne.s32.totalorder %s100, %s101
      %p112 = scmp.eq.s32.totalorder %s24, 0
      %p113 = por %p111, %p112
      %p114 = scmp.ne.s32.totalorder %s100, %s101
      %p115 = scmp.eq.s32.totalorder %s25, 1
      %p116 = por %p114, %p115
      %p118 = scmp.ne.s32.totalorder %s101, %s117
      %p119 = scmp.eq.s32.totalorder %s25, 0
      %p120 = por %p118, %p119
      %s121 = ssub.s32 %s19, %s26
      %p122 = scmp.eq.s32.totalorder %s121, 0
      %s124 = sadd.s32 %s123, 1
      %s125 = scalar_select %p122, %s123, %s124
      %p128 = pneg %p122
      %p129 = scmp.eq.s32.totalorder %s19, 1
      %p130 = por %p128, %p129
      %p131 = scmp.ne.s32.totalorder %s123, %s126
      %p132 = scmp.eq.s32.totalorder %s19, 0
      %p133 = por %p131, %p132
      %p134 = scmp.ne.s32.totalorder %s123, %s126
      %p135 = scmp.eq.s32.totalorder %s24, 1
      %p136 = por %p134, %p135
      %p137 = scmp.ne.s32.totalorder %s126, %s127
      %p138 = scmp.eq.s32.totalorder %s24, 0
      %p139 = por %p137, %p138
      %p140 = scmp.ne.s32.totalorder %s126, %s127
      %p141 = scmp.eq.s32.totalorder %s25, 1
      %p142 = por %p140, %p141
      %p144 = scmp.ne.s32.totalorder %s127, %s143
      %p145 = scmp.eq.s32.totalorder %s25, 0
      %p146 = por %p144, %p145
      %s147 = ssub.s32 %s19, %s26
      %p148 = scmp.eq.s32.totalorder %s147, 0
      %s150 = sadd.s32 %s149, 1
      %s151 = scalar_select %p148, %s149, %s150
      %p154 = pneg %p148
      %p155 = scmp.eq.s32.totalorder %s19, 1
      %p156 = por %p154, %p155
      %p157 = scmp.ne.s32.totalorder %s149, %s152
      %p158 = scmp.eq.s32.totalorder %s19, 0
      %p159 = por %p157, %p158
      %p160 = scmp.ne.s32.totalorder %s149, %s152
      %p161 = scmp.eq.s32.totalorder %s24, 1
      %p162 = por %p160, %p161
      %p163 = scmp.ne.s32.totalorder %s152, %s153
      %p164 = scmp.eq.s32.totalorder %s24, 0
      %p165 = por %p163, %p164
      %p166 = scmp.ne.s32.totalorder %s152, %s153
      %p167 = scmp.eq.s32.totalorder %s25, 1
      %p168 = por %p166, %p167
      %p170 = scmp.ne.s32.totalorder %s153, %s169
      %p171 = scmp.eq.s32.totalorder %s25, 0
      %p172 = por %p170, %p171
      %p173 = scmp.le.s32.totalorder 1, %s19
      %p174 = scmp.lt.s32.totalorder %s19, 3
      %p175 = pnand %p173, %p174
      %p176 = pneg %p175
      // Predicated region
      $region9: #{tpu_custom_call.1} parent=5 // pred_check
        _
      $region10: #{tpu_custom_call.1} parent=5 // pred_check_branch
        %178 = sbr.rel (%p175) target = $region12
      $region11: #{tpu_custom_call.1} parent=5 // pred_region
        %s179 = ssub.s32 %s19, 1
        // Predicated region
        $region13: #{tpu_custom_call.1} parent=11 // pred_check
          %p180 = pneg %p40
        $region14: #{tpu_custom_call.1} parent=11 // pred_check_branch
          %182 = sbr.rel (%p180) target = $region16
        $region15: #{tpu_custom_call.1} parent=11 // pred_region
          %s184 = ssub.s32 2048, 2048
          %185 = vsyncadd [#allocation3], %s184
          %s186 = sshll.u32 [#allocation2], 4
          %s187 = int_to_ptr.vmem [resolvable:$true] %s186
          %192 = dma.hbm_to_vmem [thread:$0]  %s0, 2048, %s187, [#allocation3], 64, 64, 4
        $region16: #{tpu_custom_call.1} parent=11 // pred_fallthru
          _
        // Predicated region
        $region17: #{tpu_custom_call.1} parent=11 // pred_check
          %p193 = pneg %p87
        $region18: #{tpu_custom_call.1} parent=11 // pred_check_branch
          %195 = sbr.rel (%p193) target = $region20
        $region19: #{tpu_custom_call.1} parent=11 // pred_region
          _
        $region20: #{tpu_custom_call.1} parent=11 // pred_fallthru
          _
      $region12: #{tpu_custom_call.1} parent=5 // pred_fallthru
        _
      %p196 = scmp.lt.s32.totalorder %s19, 2
      // Predicated region
      $region21: #{tpu_custom_call.1} parent=5 // pred_check
        %p197 = pneg %p196
      $region22: #{tpu_custom_call.1} parent=5 // pred_check_branch
        %199 = sbr.rel (%p197) target = $region24
      $region23: #{tpu_custom_call.1} parent=5 // pred_region
        // Predicated region
        $region25: #{tpu_custom_call.1} parent=23 // pred_check
          %p200 = pneg %p60
        $region26: #{tpu_custom_call.1} parent=23 // pred_check_branch
          %202 = sbr.rel (%p200) target = $region28
        $region27: #{tpu_custom_call.1} parent=23 // pred_region
          %s203 = smul.u32 16, %s19
          %p204 = scmp.lt.s32.totalorder %s203, 31
          %s205 = scalar_select %p204, %s203, 31
          %s206 = smul.addr %s205, 8
          %s207 = scalar_lea.vmem %s1, %s206
          %s208 = smul.u32 16, %s19
        $region28: #{tpu_custom_call.1} parent=23 // pred_fallthru
          _
        // Predicated region
        $region29: #{tpu_custom_call.1} parent=23 // pred_check
          %p209 = pneg %p107
        $region30: #{tpu_custom_call.1} parent=23 // pred_check_branch
          %211 = sbr.rel (%p209) target = $region32
        $region31: #{tpu_custom_call.1} parent=23 // pred_region
          %s212 = smul.u32 16, %s19
          %p213 = scmp.lt.s32.totalorder %s212, 31
          %s214 = scalar_select %p213, %s212, 31
          %s215 = smul.addr %s214, 2
          %s216 = smul.addr %s215, 4
          %s217 = scalar_lea.vmem %s3, %s216
          %s218 = smul.u32 16, %s19
        $region32: #{tpu_custom_call.1} parent=23 // pred_fallthru
          _
      $region24: #{tpu_custom_call.1} parent=5 // pred_fallthru
        _
      %p219 = scmp.le.s32.totalorder 1, %s19
      %p220 = scmp.lt.s32.totalorder %s19, 3
      %p221 = pnand %p219, %p220
      %p222 = pneg %p221
      // Predicated region
      $region33: #{tpu_custom_call.1} parent=5 // pred_check
        _
      $region34: #{tpu_custom_call.1} parent=5 // pred_check_branch
        %224 = sbr.rel (%p221) target = $region36
      $region35: #{tpu_custom_call.1} parent=5 // pred_region
        %s225 = ssub.s32 %s19, 1
        // Predicated region
        $region37: #{tpu_custom_call.1} parent=35 // pred_check
          %p226 = pneg %p40
        $region38: #{tpu_custom_call.1} parent=35 // pred_check_branch
          %228 = sbr.rel (%p226) target = $region40
        $region39: #{tpu_custom_call.1} parent=35 // pred_region
          %229 = dma.done [#allocation3], 2048
        $region40: #{tpu_custom_call.1} parent=35 // pred_fallthru
          _
        %p230 = pneg %p40
        %p231 = pneg %p37
        %s232 = smul.u32 16, %s24
        %p233 = scmp.lt.s32.totalorder %s232, 31
        %s234 = scalar_select %p233, %s232, 31
        %s235 = smul.addr %s234, 8
        %s236 = scalar_lea.vmem %s1, %s235
        %p237 = pneg %p66
        %p238 = pneg %p63
        %p239 = pneg %p87
        %p240 = pneg %p84
        %s241 = smul.u32 16, %s24
        %p242 = scmp.lt.s32.totalorder %s241, 31
        %s243 = scalar_select %p242, %s241, 31
        %s244 = smul.addr %s243, 2
        %s245 = smul.addr %s244, 4
        %s246 = scalar_lea.vmem %s3, %s245
        %p247 = pneg %p113
        %p248 = pneg %p110
        %p249 = pneg %p139
        %p250 = pneg %p136
        %s251 = sand.u32 %s126, 1
        %s252 = scalar_lea.sflag [#allocation4], %s251
        %s253 = sand.u32 %s126, 1
        %s254 = smul.addr %s253, 256
        %s255 = scalar_lea.vmem [#allocation5], %s254
        %p256 = pneg %p165
        %p257 = pneg %p162
        %s258 = sand.u32 %s152, 1
        %s259 = scalar_lea.sflag [#allocation7], %s258
        %s260 = sand.u32 %s152, 1
        %s261 = smul.addr %s260, 128
        %s262 = scalar_lea.vmem [#allocation6], %s261
        %s263 = smul.u32 16, %s24
        %p264 = scmp.lt.s32.totalorder %s263, 31
        %s265 = scalar_select %p264, %s263, 31
        %s266 = smul.addr %s265, 8
        %s267 = scalar_lea.vmem %s1, %s266
        %s268 = smul.u32 16, %s24
        %s269 = smul.u32 16, %s24
        %p270 = scmp.lt.s32.totalorder %s269, 31
        %s271 = scalar_select %p270, %s269, 31
        %s272 = smul.addr %s271, 2
        %s273 = smul.addr %s272, 4
        %s274 = scalar_lea.vmem %s3, %s273
        %s275 = smul.u32 16, %s24
        %s276 = smul.u32 16, %s24
        %s277 = smul.u32 16, %s24
        %v279 = vld [vmem:[%s267] sm:$0xff]
        %v280 = vld [vmem:[%s267 + $0x8] sm:$0xff]
        %v281 = vld [vmem:[%s267 + $0x10] sm:$0xff]
        %v282 = vld [vmem:[%s267 + $0x18] sm:$0xff]
        %v283 = vld [vmem:[%s267 + $0x20] sm:$0xff]
        %v284 = vld [vmem:[%s267 + $0x28] sm:$0xff]
        %v285 = vld [vmem:[%s267 + $0x30] sm:$0xff]
        %v286 = vld [vmem:[%s267 + $0x38] sm:$0xff]
        %v287 = vld [vmem:[%s267 + $0x40] sm:$0xff]
        %v288 = vld [vmem:[%s267 + $0x48] sm:$0xff]
        %v289 = vld [vmem:[%s267 + $0x50] sm:$0xff]
        %v290 = vld [vmem:[%s267 + $0x58] sm:$0xff]
        %v291 = vld [vmem:[%s267 + $0x60] sm:$0xff]
        %v292 = vld [vmem:[%s267 + $0x68] sm:$0xff]
        %v293 = vld [vmem:[%s267 + $0x70] sm:$0xff]
        %v294 = vld [vmem:[%s267 + $0x78] sm:$0xff]
        %v295 = vld [vmem:[%s2] sm:$0x3]
        %297 = vset.pattern.permute.xlu0 0
        %298 = vperm.xlu0 %297, %v279
        %v299 = vpop.permute.xlu0 %298
        %302 = vset.pattern.permute.xlu0 0
        %303 = vperm.xlu0 %302, %v280
        %v304 = vpop.permute.xlu0 %303
        %307 = vset.pattern.permute.xlu0 0
        %308 = vperm.xlu0 %307, %v281
        %v309 = vpop.permute.xlu0 %308
        %312 = vset.pattern.permute.xlu0 0
        %313 = vperm.xlu0 %312, %v282
        %v314 = vpop.permute.xlu0 %313
        %317 = vset.pattern.permute.xlu0 0
        %318 = vperm.xlu0 %317, %v283
        %v319 = vpop.permute.xlu0 %318
        %322 = vset.pattern.permute.xlu0 0
        %323 = vperm.xlu0 %322, %v284
        %v324 = vpop.permute.xlu0 %323
        %327 = vset.pattern.permute.xlu0 0
        %328 = vperm.xlu0 %327, %v285
        %v329 = vpop.permute.xlu0 %328
        %332 = vset.pattern.permute.xlu0 0
        %333 = vperm.xlu0 %332, %v286
        %v334 = vpop.permute.xlu0 %333
        %337 = vset.pattern.permute.xlu0 0
        %338 = vperm.xlu0 %337, %v287
        %v339 = vpop.permute.xlu0 %338
        %342 = vset.pattern.permute.xlu0 0
        %343 = vperm.xlu0 %342, %v288
        %v344 = vpop.permute.xlu0 %343
        %347 = vset.pattern.permute.xlu0 0
        %348 = vperm.xlu0 %347, %v289
        %v349 = vpop.permute.xlu0 %348
        %352 = vset.pattern.permute.xlu0 0
        %353 = vperm.xlu0 %352, %v290
        %v354 = vpop.permute.xlu0 %353
        %357 = vset.pattern.permute.xlu0 0
        %358 = vperm.xlu0 %357, %v291
        %v359 = vpop.permute.xlu0 %358
        %362 = vset.pattern.permute.xlu0 0
        %363 = vperm.xlu0 %362, %v292
        %v364 = vpop.permute.xlu0 %363
        %367 = vset.pattern.permute.xlu0 0
        %368 = vperm.xlu0 %367, %v293
        %v369 = vpop.permute.xlu0 %368
        %372 = vset.pattern.permute.xlu0 0
        %373 = vperm.xlu0 %372, %v294
        %v374 = vpop.permute.xlu0 %373
        %v377 = vlaneseq
        %v378 = vshrl.u32 %v377, 7
        %v379 = vsub.s32 0, %v378
        %v380 = vrot.slane %v295, %v379
        %v381 = vlaneseq
        %v382 = vshrl.u32 %v381, 7
        %v383 = vsub.s32 1, %v382
        %v384 = vrot.slane %v295, %v383
        %v387 = vadd.f32 %v299, %v380
        %v388 = vadd.f32 %v299, %v384
        %v389 = vadd.f32 %v304, %v380
        %v390 = vadd.f32 %v304, %v384
        %v391 = vadd.f32 %v309, %v380
        %v392 = vadd.f32 %v309, %v384
        %v393 = vadd.f32 %v314, %v380
        %v394 = vadd.f32 %v314, %v384
        %v395 = vadd.f32 %v319, %v380
        %v396 = vadd.f32 %v319, %v384
        %v397 = vadd.f32 %v324, %v380
        %v398 = vadd.f32 %v324, %v384
        %v399 = vadd.f32 %v329, %v380
        %v400 = vadd.f32 %v329, %v384
        %v401 = vadd.f32 %v334, %v380
        %v402 = vadd.f32 %v334, %v384
        %v403 = vadd.f32 %v339, %v380
        %v404 = vadd.f32 %v339, %v384
        %v405 = vadd.f32 %v344, %v380
        %v406 = vadd.f32 %v344, %v384
        %v407 = vadd.f32 %v349, %v380
        %v408 = vadd.f32 %v349, %v384
        %v409 = vadd.f32 %v354, %v380
        %v410 = vadd.f32 %v354, %v384
        %v411 = vadd.f32 %v359, %v380
        %v412 = vadd.f32 %v359, %v384
        %v413 = vadd.f32 %v364, %v380
        %v414 = vadd.f32 %v364, %v384
        %v415 = vadd.f32 %v369, %v380
        %v416 = vadd.f32 %v369, %v384
        %v417 = vadd.f32 %v374, %v380
        %v418 = vadd.f32 %v374, %v384
        %vm419 = vcmp.gt.f32.partialorder %v387, 0.0
        %vm420 = vcmp.gt.f32.partialorder %v388, 0.0
        %vm421 = vcmp.gt.f32.partialorder %v389, 0.0
        %vm422 = vcmp.gt.f32.partialorder %v390, 0.0
        %vm423 = vcmp.gt.f32.partialorder %v391, 0.0
        %vm424 = vcmp.gt.f32.partialorder %v392, 0.0
        %vm425 = vcmp.gt.f32.partialorder %v393, 0.0
        %vm426 = vcmp.gt.f32.partialorder %v394, 0.0
        %vm427 = vcmp.gt.f32.partialorder %v395, 0.0
        %vm428 = vcmp.gt.f32.partialorder %v396, 0.0
        %vm429 = vcmp.gt.f32.partialorder %v397, 0.0
        %vm430 = vcmp.gt.f32.partialorder %v398, 0.0
        %vm431 = vcmp.gt.f32.partialorder %v399, 0.0
        %vm432 = vcmp.gt.f32.partialorder %v400, 0.0
        %vm433 = vcmp.gt.f32.partialorder %v401, 0.0
        %vm434 = vcmp.gt.f32.partialorder %v402, 0.0
        %vm435 = vcmp.gt.f32.partialorder %v403, 0.0
        %vm436 = vcmp.gt.f32.partialorder %v404, 0.0
        %vm437 = vcmp.gt.f32.partialorder %v405, 0.0
        %vm438 = vcmp.gt.f32.partialorder %v406, 0.0
        %vm439 = vcmp.gt.f32.partialorder %v407, 0.0
        %vm440 = vcmp.gt.f32.partialorder %v408, 0.0
        %vm441 = vcmp.gt.f32.partialorder %v409, 0.0
        %vm442 = vcmp.gt.f32.partialorder %v410, 0.0
        %vm443 = vcmp.gt.f32.partialorder %v411, 0.0
        %vm444 = vcmp.gt.f32.partialorder %v412, 0.0
        %vm445 = vcmp.gt.f32.partialorder %v413, 0.0
        %vm446 = vcmp.gt.f32.partialorder %v414, 0.0
        %vm447 = vcmp.gt.f32.partialorder %v415, 0.0
        %vm448 = vcmp.gt.f32.partialorder %v416, 0.0
        %vm449 = vcmp.gt.f32.partialorder %v417, 0.0
        %vm450 = vcmp.gt.f32.partialorder %v418, 0.0
        %v451 = vmul.f32 %v387, 0.01
        %v452 = vmul.f32 %v388, 0.01
        %v453 = vmul.f32 %v389, 0.01
        %v454 = vmul.f32 %v390, 0.01
        %v455 = vmul.f32 %v391, 0.01
        %v456 = vmul.f32 %v392, 0.01
        %v457 = vmul.f32 %v393, 0.01
        %v458 = vmul.f32 %v394, 0.01
        %v459 = vmul.f32 %v395, 0.01
        %v460 = vmul.f32 %v396, 0.01
        %v461 = vmul.f32 %v397, 0.01
        %v462 = vmul.f32 %v398, 0.01
        %v463 = vmul.f32 %v399, 0.01
        %v464 = vmul.f32 %v400, 0.01
        %v465 = vmul.f32 %v401, 0.01
        %v466 = vmul.f32 %v402, 0.01
        %v467 = vmul.f32 %v403, 0.01
        %v468 = vmul.f32 %v404, 0.01
        %v469 = vmul.f32 %v405, 0.01
        %v470 = vmul.f32 %v406, 0.01
        %v471 = vmul.f32 %v407, 0.01
        %v472 = vmul.f32 %v408, 0.01
        %v473 = vmul.f32 %v409, 0.01
        %v474 = vmul.f32 %v410, 0.01
        %v475 = vmul.f32 %v411, 0.01
        %v476 = vmul.f32 %v412, 0.01
        %v477 = vmul.f32 %v413, 0.01
        %v478 = vmul.f32 %v414, 0.01
        %v479 = vmul.f32 %v415, 0.01
        %v480 = vmul.f32 %v416, 0.01
        %v481 = vmul.f32 %v417, 0.01
        %v482 = vmul.f32 %v418, 0.01
        %v483 = vsel %vm419, %v387, %v451
        %v484 = vsel %vm420, %v388, %v452
        %v485 = vsel %vm421, %v389, %v453
        %v486 = vsel %vm422, %v390, %v454
        %v487 = vsel %vm423, %v391, %v455
        %v488 = vsel %vm424, %v392, %v456
        %v489 = vsel %vm425, %v393, %v457
        %v490 = vsel %vm426, %v394, %v458
        %v491 = vsel %vm427, %v395, %v459
        %v492 = vsel %vm428, %v396, %v460
        %v493 = vsel %vm429, %v397, %v461
        %v494 = vsel %vm430, %v398, %v462
        %v495 = vsel %vm431, %v399, %v463
        %v496 = vsel %vm432, %v400, %v464
        %v497 = vsel %vm433, %v401, %v465
        %v498 = vsel %vm434, %v402, %v466
        %v499 = vsel %vm435, %v403, %v467
        %v500 = vsel %vm436, %v404, %v468
        %v501 = vsel %vm437, %v405, %v469
        %v502 = vsel %vm438, %v406, %v470
        %v503 = vsel %vm439, %v407, %v471
        %v504 = vsel %vm440, %v408, %v472
        %v505 = vsel %vm441, %v409, %v473
        %v506 = vsel %vm442, %v410, %v474
        %v507 = vsel %vm443, %v411, %v475
        %v508 = vsel %vm444, %v412, %v476
        %v509 = vsel %vm445, %v413, %v477
        %v510 = vsel %vm446, %v414, %v478
        %v511 = vsel %vm447, %v415, %v479
        %v512 = vsel %vm448, %v416, %v480
        %v513 = vsel %vm449, %v417, %v481
        %v514 = vsel %vm450, %v418, %v482
        %v515 = vld [vmem:[%s274] sm:$0xff]
        %v516 = vld [vmem:[%s274 + $0x8] sm:$0xff]
        %v517 = vld [vmem:[%s274 + $0x10] sm:$0xff]
        %v518 = vld [vmem:[%s274 + $0x18] sm:$0xff]
        %v519 = vld [vmem:[%s274 + $0x20] sm:$0xff]
        %v520 = vld [vmem:[%s274 + $0x28] sm:$0xff]
        %v521 = vld [vmem:[%s274 + $0x30] sm:$0xff]
        %v522 = vld [vmem:[%s274 + $0x38] sm:$0xff]
        %v523 = vld [vmem:[%s274 + $0x40] sm:$0xff]
        %v524 = vld [vmem:[%s274 + $0x48] sm:$0xff]
        %v525 = vld [vmem:[%s274 + $0x50] sm:$0xff]
        %v526 = vld [vmem:[%s274 + $0x58] sm:$0xff]
        %v527 = vld [vmem:[%s274 + $0x60] sm:$0xff]
        %v528 = vld [vmem:[%s274 + $0x68] sm:$0xff]
        %v529 = vld [vmem:[%s274 + $0x70] sm:$0xff]
        %v530 = vld [vmem:[%s274 + $0x78] sm:$0xff]
        %v531 = vunpack.c.l.bf16 %v515
        %v532 = vunpack.c.h.bf16 %v515
        %v533 = vunpack.c.l.bf16 %v516
        %v534 = vunpack.c.h.bf16 %v516
        %v535 = vunpack.c.l.bf16 %v517
        %v536 = vunpack.c.h.bf16 %v517
        %v537 = vunpack.c.l.bf16 %v518
        %v538 = vunpack.c.h.bf16 %v518
        %v539 = vunpack.c.l.bf16 %v519
        %v540 = vunpack.c.h.bf16 %v519
        %v541 = vunpack.c.l.bf16 %v520
        %v542 = vunpack.c.h.bf16 %v520
        %v543 = vunpack.c.l.bf16 %v521
        %v544 = vunpack.c.h.bf16 %v521
        %v545 = vunpack.c.l.bf16 %v522
        %v546 = vunpack.c.h.bf16 %v522
        %v547 = vunpack.c.l.bf16 %v523
        %v548 = vunpack.c.h.bf16 %v523
        %v549 = vunpack.c.l.bf16 %v524
        %v550 = vunpack.c.h.bf16 %v524
        %v551 = vunpack.c.l.bf16 %v525
        %v552 = vunpack.c.h.bf16 %v525
        %v553 = vunpack.c.l.bf16 %v526
        %v554 = vunpack.c.h.bf16 %v526
        %v555 = vunpack.c.l.bf16 %v527
        %v556 = vunpack.c.h.bf16 %v527
        %v557 = vunpack.c.l.bf16 %v528
        %v558 = vunpack.c.h.bf16 %v528
        %v559 = vunpack.c.l.bf16 %v529
        %v560 = vunpack.c.h.bf16 %v529
        %v561 = vunpack.c.l.bf16 %v530
        %v562 = vunpack.c.h.bf16 %v530
        %v563 = vadd.f32 %v483, %v531
        %v564 = vadd.f32 %v484, %v532
        %v565 = vadd.f32 %v485, %v533
        %v566 = vadd.f32 %v486, %v534
        %v567 = vadd.f32 %v487, %v535
        %v568 = vadd.f32 %v488, %v536
        %v569 = vadd.f32 %v489, %v537
        %v570 = vadd.f32 %v490, %v538
        %v571 = vadd.f32 %v491, %v539
        %v572 = vadd.f32 %v492, %v540
        %v573 = vadd.f32 %v493, %v541
        %v574 = vadd.f32 %v494, %v542
        %v575 = vadd.f32 %v495, %v543
        %v576 = vadd.f32 %v496, %v544
        %v577 = vadd.f32 %v497, %v545
        %v578 = vadd.f32 %v498, %v546
        %v579 = vadd.f32 %v499, %v547
        %v580 = vadd.f32 %v500, %v548
        %v581 = vadd.f32 %v501, %v549
        %v582 = vadd.f32 %v502, %v550
        %v583 = vadd.f32 %v503, %v551
        %v584 = vadd.f32 %v504, %v552
        %v585 = vadd.f32 %v505, %v553
        %v586 = vadd.f32 %v506, %v554
        %v587 = vadd.f32 %v507, %v555
        %v588 = vadd.f32 %v508, %v556
        %v589 = vadd.f32 %v509, %v557
        %v590 = vadd.f32 %v510, %v558
        %v591 = vadd.f32 %v511, %v559
        %v592 = vadd.f32 %v512, %v560
        %v593 = vadd.f32 %v513, %v561
        %v594 = vadd.f32 %v514, %v562
        %v595 = vmax.f32 %v563, %v564
        %596 = vmax.xlane.f32.xlu0 %v595
        %v597 = vpop.xlane.xlu0 %596
        %v598 = vmax.f32 %v565, %v566
        %599 = vmax.xlane.f32.xlu0 %v598
        %v600 = vpop.xlane.xlu0 %599
        %v601 = vmax.f32 %v567, %v568
        %602 = vmax.xlane.f32.xlu0 %v601
        %v603 = vpop.xlane.xlu0 %602
        %v604 = vmax.f32 %v569, %v570
        %605 = vmax.xlane.f32.xlu0 %v604
        %v606 = vpop.xlane.xlu0 %605
        %v607 = vmax.f32 %v571, %v572
        %608 = vmax.xlane.f32.xlu0 %v607
        %v609 = vpop.xlane.xlu0 %608
        %v610 = vmax.f32 %v573, %v574
        %611 = vmax.xlane.f32.xlu0 %v610
        %v612 = vpop.xlane.xlu0 %611
        %v613 = vmax.f32 %v575, %v576
        %614 = vmax.xlane.f32.xlu0 %v613
        %v615 = vpop.xlane.xlu0 %614
        %v616 = vmax.f32 %v577, %v578
        %617 = vmax.xlane.f32.xlu0 %v616
        %v618 = vpop.xlane.xlu0 %617
        %v619 = vmax.f32 %v579, %v580
        %620 = vmax.xlane.f32.xlu0 %v619
        %v621 = vpop.xlane.xlu0 %620
        %v622 = vmax.f32 %v581, %v582
        %623 = vmax.xlane.f32.xlu0 %v622
        %v624 = vpop.xlane.xlu0 %623
        %v625 = vmax.f32 %v583, %v584
        %626 = vmax.xlane.f32.xlu0 %v625
        %v627 = vpop.xlane.xlu0 %626
        %v628 = vmax.f32 %v585, %v586
        %629 = vmax.xlane.f32.xlu0 %v628
        %v630 = vpop.xlane.xlu0 %629
        %v631 = vmax.f32 %v587, %v588
        %632 = vmax.xlane.f32.xlu0 %v631
        %v633 = vpop.xlane.xlu0 %632
        %v634 = vmax.f32 %v589, %v590
        %635 = vmax.xlane.f32.xlu0 %v634
        %v636 = vpop.xlane.xlu0 %635
        %v637 = vmax.f32 %v591, %v592
        %638 = vmax.xlane.f32.xlu0 %v637
        %v639 = vpop.xlane.xlu0 %638
        %v640 = vmax.f32 %v593, %v594
        %641 = vmax.xlane.f32.xlu0 %v640
        %v642 = vpop.xlane.xlu0 %641
        %v643 = vsub.f32 %v563, %v597
        %v644 = vsub.f32 %v564, %v597
        %v645 = vsub.f32 %v565, %v600
        %v646 = vsub.f32 %v566, %v600
        %v647 = vsub.f32 %v567, %v603
        %v648 = vsub.f32 %v568, %v603
        %v649 = vsub.f32 %v569, %v606
        %v650 = vsub.f32 %v570, %v606
        %v651 = vsub.f32 %v571, %v609
        %v652 = vsub.f32 %v572, %v609
        %v653 = vsub.f32 %v573, %v612
        %v654 = vsub.f32 %v574, %v612
        %v655 = vsub.f32 %v575, %v615
        %v656 = vsub.f32 %v576, %v615
        %v657 = vsub.f32 %v577, %v618
        %v658 = vsub.f32 %v578, %v618
        %v659 = vsub.f32 %v579, %v621
        %v660 = vsub.f32 %v580, %v621
        %v661 = vsub.f32 %v581, %v624
        %v662 = vsub.f32 %v582, %v624
        %v663 = vsub.f32 %v583, %v627
        %v664 = vsub.f32 %v584, %v627
        %v665 = vsub.f32 %v585, %v630
        %v666 = vsub.f32 %v586, %v630
        %v667 = vsub.f32 %v587, %v633
        %v668 = vsub.f32 %v588, %v633
        %v669 = vsub.f32 %v589, %v636
        %v670 = vsub.f32 %v590, %v636
        %v671 = vsub.f32 %v591, %v639
        %v672 = vsub.f32 %v592, %v639
        %v673 = vsub.f32 %v593, %v642
        %v674 = vsub.f32 %v594, %v642
        %v675 = vmul.f32 %v643, 1.442695
        %v676 = vpow.pop %v675
        %v677 = vmul.f32 %v644, 1.442695
        %v678 = vpow.pop %v677
        %v679 = vmul.f32 %v645, 1.442695
        %v680 = vpow.pop %v679
        %v681 = vmul.f32 %v646, 1.442695
        %v682 = vpow.pop %v681
        %v683 = vmul.f32 %v647, 1.442695
        %v684 = vpow.pop %v683
        %v685 = vmul.f32 %v648, 1.442695
        %v686 = vpow.pop %v685
        %v687 = vmul.f32 %v649, 1.442695
        %v688 = vpow.pop %v687
        %v689 = vmul.f32 %v650, 1.442695
        %v690 = vpow.pop %v689
        %v691 = vmul.f32 %v651, 1.442695
        %v692 = vpow.pop %v691
        %v693 = vmul.f32 %v652, 1.442695
        %v694 = vpow.pop %v693
        %v695 = vmul.f32 %v653, 1.442695
        %v696 = vpow.pop %v695
        %v697 = vmul.f32 %v654, 1.442695
        %v698 = vpow.pop %v697
        %v699 = vmul.f32 %v655, 1.442695
        %v700 = vpow.pop %v699
        %v701 = vmul.f32 %v656, 1.442695
        %v702 = vpow.pop %v701
        %v703 = vmul.f32 %v657, 1.442695
        %v704 = vpow.pop %v703
        %v705 = vmul.f32 %v658, 1.442695
        %v706 = vpow.pop %v705
        %v707 = vmul.f32 %v659, 1.442695
        %v708 = vpow.pop %v707
        %v709 = vmul.f32 %v660, 1.442695
        %v710 = vpow.pop %v709
        %v711 = vmul.f32 %v661, 1.442695
        %v712 = vpow.pop %v711
        %v713 = vmul.f32 %v662, 1.442695
        %v714 = vpow.pop %v713
        %v715 = vmul.f32 %v663, 1.442695
        %v716 = vpow.pop %v715
        %v717 = vmul.f32 %v664, 1.442695
        %v718 = vpow.pop %v717
        %v719 = vmul.f32 %v665, 1.442695
        %v720 = vpow.pop %v719
        %v721 = vmul.f32 %v666, 1.442695
        %v722 = vpow.pop %v721
        %v723 = vmul.f32 %v667, 1.442695
        %v724 = vpow.pop %v723
        %v725 = vmul.f32 %v668, 1.442695
        %v726 = vpow.pop %v725
        %v727 = vmul.f32 %v669, 1.442695
        %v728 = vpow.pop %v727
        %v729 = vmul.f32 %v670, 1.442695
        %v730 = vpow.pop %v729
        %v731 = vmul.f32 %v671, 1.442695
        %v732 = vpow.pop %v731
        %v733 = vmul.f32 %v672, 1.442695
        %v734 = vpow.pop %v733
        %v735 = vmul.f32 %v673, 1.442695
        %v736 = vpow.pop %v735
        %v737 = vmul.f32 %v674, 1.442695
        %v738 = vpow.pop %v737
        %v739 = vadd.f32 %v676, %v678
        %740 = vadd.xlane.f32.xlu0 %v739
        %v741 = vpop.xlane.xlu0 %740
        %v742 = vadd.f32 %v680, %v682
        %743 = vadd.xlane.f32.xlu0 %v742
        %v744 = vpop.xlane.xlu0 %743
        %v745 = vadd.f32 %v684, %v686
        %746 = vadd.xlane.f32.xlu0 %v745
        %v747 = vpop.xlane.xlu0 %746
        %v748 = vadd.f32 %v688, %v690
        %749 = vadd.xlane.f32.xlu0 %v748
        %v750 = vpop.xlane.xlu0 %749
        %v751 = vadd.f32 %v692, %v694
        %752 = vadd.xlane.f32.xlu0 %v751
        %v753 = vpop.xlane.xlu0 %752
        %v754 = vadd.f32 %v696, %v698
        %755 = vadd.xlane.f32.xlu0 %v754
        %v756 = vpop.xlane.xlu0 %755
        %v757 = vadd.f32 %v700, %v702
        %758 = vadd.xlane.f32.xlu0 %v757
        %v759 = vpop.xlane.xlu0 %758
        %v760 = vadd.f32 %v704, %v706
        %761 = vadd.xlane.f32.xlu0 %v760
        %v762 = vpop.xlane.xlu0 %761
        %v763 = vadd.f32 %v708, %v710
        %764 = vadd.xlane.f32.xlu0 %v763
        %v765 = vpop.xlane.xlu0 %764
        %v766 = vadd.f32 %v712, %v714
        %767 = vadd.xlane.f32.xlu0 %v766
        %v768 = vpop.xlane.xlu0 %767
        %v769 = vadd.f32 %v716, %v718
        %770 = vadd.xlane.f32.xlu0 %v769
        %v771 = vpop.xlane.xlu0 %770
        %v772 = vadd.f32 %v720, %v722
        %773 = vadd.xlane.f32.xlu0 %v772
        %v774 = vpop.xlane.xlu0 %773
        %v775 = vadd.f32 %v724, %v726
        %776 = vadd.xlane.f32.xlu0 %v775
        %v777 = vpop.xlane.xlu0 %776
        %v778 = vadd.f32 %v728, %v730
        %779 = vadd.xlane.f32.xlu0 %v778
        %v780 = vpop.xlane.xlu0 %779
        %v781 = vadd.f32 %v732, %v734
        %782 = vadd.xlane.f32.xlu0 %v781
        %v783 = vpop.xlane.xlu0 %782
        %v784 = vadd.f32 %v736, %v738
        %785 = vadd.xlane.f32.xlu0 %v784
        %v786 = vpop.xlane.xlu0 %785
        %v787 = vrcp.pop %v741
        %v788 = vrcp.pop %v744
        %v789 = vrcp.pop %v747
        %v790 = vrcp.pop %v750
        %v791 = vrcp.pop %v753
        %v792 = vrcp.pop %v756
        %v793 = vrcp.pop %v759
        %v794 = vrcp.pop %v762
        %v795 = vrcp.pop %v765
        %v796 = vrcp.pop %v768
        %v797 = vrcp.pop %v771
        %v798 = vrcp.pop %v774
        %v799 = vrcp.pop %v777
        %v800 = vrcp.pop %v780
        %v801 = vrcp.pop %v783
        %v802 = vrcp.pop %v786
        %v803 = vmul.f32 %v676, %v787
        %v804 = vmul.f32 %v678, %v787
        %v805 = vmul.f32 %v680, %v788
        %v806 = vmul.f32 %v682, %v788
        %v807 = vmul.f32 %v684, %v789
        %v808 = vmul.f32 %v686, %v789
        %v809 = vmul.f32 %v688, %v790
        %v810 = vmul.f32 %v690, %v790
        %v811 = vmul.f32 %v692, %v791
        %v812 = vmul.f32 %v694, %v791
        %v813 = vmul.f32 %v696, %v792
        %v814 = vmul.f32 %v698, %v792
        %v815 = vmul.f32 %v700, %v793
        %v816 = vmul.f32 %v702, %v793
        %v817 = vmul.f32 %v704, %v794
        %v818 = vmul.f32 %v706, %v794
        %v819 = vmul.f32 %v708, %v795
        %v820 = vmul.f32 %v710, %v795
        %v821 = vmul.f32 %v712, %v796
        %v822 = vmul.f32 %v714, %v796
        %v823 = vmul.f32 %v716, %v797
        %v824 = vmul.f32 %v718, %v797
        %v825 = vmul.f32 %v720, %v798
        %v826 = vmul.f32 %v722, %v798
        %v827 = vmul.f32 %v724, %v799
        %v828 = vmul.f32 %v726, %v799
        %v829 = vmul.f32 %v728, %v800
        %v830 = vmul.f32 %v730, %v800
        %v831 = vmul.f32 %v732, %v801
        %v832 = vmul.f32 %v734, %v801
        %v833 = vmul.f32 %v736, %v802
        %v834 = vmul.f32 %v738, %v802
        %v835 = vpack.c.bf16 %v805, %v803
        %v836 = vpack.c.bf16 %v806, %v804
        %v837 = vpack.c.bf16 %v809, %v807
        %v838 = vpack.c.bf16 %v810, %v808
        %v839 = vpack.c.bf16 %v813, %v811
        %v840 = vpack.c.bf16 %v814, %v812
        %v841 = vpack.c.bf16 %v817, %v815
        %v842 = vpack.c.bf16 %v818, %v816
        %v843 = vpack.c.bf16 %v821, %v819
        %v844 = vpack.c.bf16 %v822, %v820
        %v845 = vpack.c.bf16 %v825, %v823
        %v846 = vpack.c.bf16 %v826, %v824
        %v847 = vpack.c.bf16 %v829, %v827
        %v848 = vpack.c.bf16 %v830, %v828
        %v849 = vpack.c.bf16 %v833, %v831
        %v850 = vpack.c.bf16 %v834, %v832
        %v851 = vld [vmem:[#allocation2] sm:$0xf]
        %v852 = vld [vmem:[#allocation2 + $0x4] sm:$0xf]
        %v853 = vld [vmem:[#allocation2 + $0x8] sm:$0xf]
        %v854 = vld [vmem:[#allocation2 + $0xc] sm:$0xf]
        %v855 = vld [vmem:[#allocation2 + $0x10] sm:$0xf]
        %v856 = vld [vmem:[#allocation2 + $0x14] sm:$0xf]
        %v857 = vld [vmem:[#allocation2 + $0x18] sm:$0xf]
        %v858 = vld [vmem:[#allocation2 + $0x1c] sm:$0xf]
        %v859 = vld [vmem:[#allocation2 + $0x20] sm:$0xf]
        %v860 = vld [vmem:[#allocation2 + $0x24] sm:$0xf]
        %v861 = vld [vmem:[#allocation2 + $0x28] sm:$0xf]
        %v862 = vld [vmem:[#allocation2 + $0x2c] sm:$0xf]
        %v863 = vld [vmem:[#allocation2 + $0x30] sm:$0xf]
        %v864 = vld [vmem:[#allocation2 + $0x34] sm:$0xf]
        %v865 = vld [vmem:[#allocation2 + $0x38] sm:$0xf]
        %v866 = vld [vmem:[#allocation2 + $0x3c] sm:$0xf]
        %v867 = vld [vmem:[#allocation2 + $0x40] sm:$0xf]
        %v868 = vld [vmem:[#allocation2 + $0x44] sm:$0xf]
        %v869 = vld [vmem:[#allocation2 + $0x48] sm:$0xf]
        %v870 = vld [vmem:[#allocation2 + $0x4c] sm:$0xf]
        %v871 = vld [vmem:[#allocation2 + $0x50] sm:$0xf]
        %v872 = vld [vmem:[#allocation2 + $0x54] sm:$0xf]
        %v873 = vld [vmem:[#allocation2 + $0x58] sm:$0xf]
        %v874 = vld [vmem:[#allocation2 + $0x5c] sm:$0xf]
        %v875 = vld [vmem:[#allocation2 + $0x60] sm:$0xf]
        %v876 = vld [vmem:[#allocation2 + $0x64] sm:$0xf]
        %v877 = vld [vmem:[#allocation2 + $0x68] sm:$0xf]
        %v878 = vld [vmem:[#allocation2 + $0x6c] sm:$0xf]
        %v879 = vld [vmem:[#allocation2 + $0x70] sm:$0xf]
        %v880 = vld [vmem:[#allocation2 + $0x74] sm:$0xf]
        %v881 = vld [vmem:[#allocation2 + $0x78] sm:$0xf]
        %v882 = vld [vmem:[#allocation2 + $0x7c] sm:$0xf]
        %v915 = vunpack.c.l.b16 %v851
        %v916 = vunpack.c.l.b16 %v852
        %v917 = vunpack.c.l.b16 %v853
        %v918 = vunpack.c.l.b16 %v854
        %v919 = vunpack.c.l.b16 %v855
        %v920 = vunpack.c.l.b16 %v856
        %v921 = vunpack.c.l.b16 %v857
        %v922 = vunpack.c.l.b16 %v858
        %v923 = vunpack.c.l.b16 %v859
        %v924 = vunpack.c.l.b16 %v860
        %v925 = vunpack.c.l.b16 %v861
        %v926 = vunpack.c.l.b16 %v862
        %v927 = vunpack.c.l.b16 %v863
        %v928 = vunpack.c.l.b16 %v864
        %v929 = vunpack.c.l.b16 %v865
        %v930 = vunpack.c.l.b16 %v866
        %v931 = vunpack.c.l.b16 %v867
        %v932 = vunpack.c.l.b16 %v868
        %v933 = vunpack.c.l.b16 %v869
        %v934 = vunpack.c.l.b16 %v870
        %v935 = vunpack.c.l.b16 %v871
        %v936 = vunpack.c.l.b16 %v872
        %v937 = vunpack.c.l.b16 %v873
        %v938 = vunpack.c.l.b16 %v874
        %v939 = vunpack.c.l.b16 %v875
        %v940 = vunpack.c.l.b16 %v876
        %v941 = vunpack.c.l.b16 %v877
        %v942 = vunpack.c.l.b16 %v878
        %v943 = vunpack.c.l.b16 %v879
        %v944 = vunpack.c.l.b16 %v880
        %v945 = vunpack.c.l.b16 %v881
        %v946 = vunpack.c.l.b16 %v882
        %v947 = vpack.c.b16 %v916, %v915
        %v948 = vpack.c.b16 %v918, %v917
        %v949 = vpack.c.b16 %v920, %v919
        %v950 = vpack.c.b16 %v922, %v921
        %v951 = vpack.c.b16 %v924, %v923
        %v952 = vpack.c.b16 %v926, %v925
        %v953 = vpack.c.b16 %v928, %v927
        %v954 = vpack.c.b16 %v930, %v929
        %v955 = vpack.c.b16 %v932, %v931
        %v956 = vpack.c.b16 %v934, %v933
        %v957 = vpack.c.b16 %v936, %v935
        %v958 = vpack.c.b16 %v938, %v937
        %v959 = vpack.c.b16 %v940, %v939
        %v960 = vpack.c.b16 %v942, %v941
        %v961 = vpack.c.b16 %v944, %v943
        %v962 = vpack.c.b16 %v946, %v945
        %979 = vmatprep.subr.bf16.mxu0 0
        %980 = vmatpush1.bf16.msra.mxu0 %v954
        %981 = vmatprep.subr.bf16.mxu0 0
        %982 = vmatpush1.bf16.msra.mxu0 %v953
        %983 = vmatprep.subr.bf16.mxu0 0
        %984 = vmatpush1.bf16.msra.mxu0 %v952
        %985 = vmatprep.subr.bf16.mxu0 0
        %986 = vmatpush1.bf16.msra.mxu0 %v951
        %987 = vmatprep.subr.bf16.mxu0 0
        %988 = vmatpush1.bf16.msra.mxu0 %v950
        %989 = vmatprep.subr.bf16.mxu0 0
        %990 = vmatpush1.bf16.msra.mxu0 %v949
        %991 = vmatprep.subr.bf16.mxu0 0
        %992 = vmatpush1.bf16.msra.mxu0 %v948
        %993 = vmatprep.subr.bf16.mxu0 0
        %994 = vmatpush1.bf16.msra.mxu0 %v947
        %995 = vmatprep.subr.bf16.mxu0 0
        %996 = vmatpush2.bf16.msra.mxu0 %v962
        %997 = vmatprep.subr.bf16.mxu0 0
        %998 = vmatpush2.bf16.msra.mxu0 %v961
        %999 = vmatprep.subr.bf16.mxu0 0
        %1000 = vmatpush2.bf16.msra.mxu0 %v960
        %1001 = vmatprep.subr.bf16.mxu0 0
        %1002 = vmatpush2.bf16.msra.mxu0 %v959
        %1003 = vmatprep.subr.bf16.mxu0 0
        %1004 = vmatpush2.bf16.msra.mxu0 %v958
        %1005 = vmatprep.subr.bf16.mxu0 0
        %1006 = vmatpush2.bf16.msra.mxu0 %v957
        %1007 = vmatprep.subr.bf16.mxu0 0
        %1008 = vmatpush2.bf16.msra.mxu0 %v956
        %1009 = vmatprep.subr.bf16.mxu0 0
        %1010 = vmatpush2.bf16.msra.mxu0 %v955
        %1011 = vmatprep.mubr.bf16.mxu0 %v836
        %1012 = vmatmul.mubr.bf16.gmra.mxu0 %v835
        %v1013 = vpop.f32.mrf.mxu0
        %v1014 = vadd.f32 0.0, %v1013
        %v1015 = vpop.f32.mrf.mxu0
        %v1016 = vpop.f32.mrf.mxu0
        %v1017 = vadd.f32 0.0, %v1016
        %v1018 = vpop.f32.mrf.mxu0
        %1019 = vmatprep.mubr.bf16.mxu0 %v838
        %1020 = vmatmul.mubr.bf16.gmra.mxu0 %v837
        %v1021 = vpop.f32.mrf.mxu0
        %v1022 = vadd.f32 0.0, %v1021
        %v1023 = vpop.f32.mrf.mxu0
        %v1024 = vpop.f32.mrf.mxu0
        %v1025 = vadd.f32 0.0, %v1024
        %v1026 = vpop.f32.mrf.mxu0
        %1027 = vmatprep.mubr.bf16.mxu0 %v840
        %1028 = vmatmul.mubr.bf16.gmra.mxu0 %v839
        %v1029 = vpop.f32.mrf.mxu0
        %v1030 = vadd.f32 0.0, %v1029
        %v1031 = vpop.f32.mrf.mxu0
        %v1032 = vpop.f32.mrf.mxu0
        %v1033 = vadd.f32 0.0, %v1032
        %v1034 = vpop.f32.mrf.mxu0
        %1035 = vmatprep.mubr.bf16.mxu0 %v842
        %1036 = vmatmul.mubr.bf16.gmra.mxu0 %v841
        %v1037 = vpop.f32.mrf.mxu0
        %v1038 = vadd.f32 0.0, %v1037
        %v1039 = vpop.f32.mrf.mxu0
        %v1040 = vpop.f32.mrf.mxu0
        %v1041 = vadd.f32 0.0, %v1040
        %v1042 = vpop.f32.mrf.mxu0
        %1043 = vmatprep.mubr.bf16.mxu0 %v844
        %1044 = vmatmul.mubr.bf16.gmra.mxu0 %v843
        %v1045 = vpop.f32.mrf.mxu0
        %v1046 = vadd.f32 0.0, %v1045
        %v1047 = vpop.f32.mrf.mxu0
        %v1048 = vpop.f32.mrf.mxu0
        %v1049 = vadd.f32 0.0, %v1048
        %v1050 = vpop.f32.mrf.mxu0
        %1051 = vmatprep.mubr.bf16.mxu0 %v846
        %1052 = vmatmul.mubr.bf16.gmra.mxu0 %v845
        %v1053 = vpop.f32.mrf.mxu0
        %v1054 = vadd.f32 0.0, %v1053
        %v1055 = vpop.f32.mrf.mxu0
        %v1056 = vpop.f32.mrf.mxu0
        %v1057 = vadd.f32 0.0, %v1056
        %v1058 = vpop.f32.mrf.mxu0
        %1059 = vmatprep.mubr.bf16.mxu0 %v848
        %1060 = vmatmul.mubr.bf16.gmra.mxu0 %v847
        %v1061 = vpop.f32.mrf.mxu0
        %v1062 = vadd.f32 0.0, %v1061
        %v1063 = vpop.f32.mrf.mxu0
        %v1064 = vpop.f32.mrf.mxu0
        %v1065 = vadd.f32 0.0, %v1064
        %v1066 = vpop.f32.mrf.mxu0
        %1067 = vmatprep.mubr.bf16.mxu0 %v850
        %1068 = vmatmul.mubr.bf16.gmra.mxu0 %v849
        %v1069 = vpop.f32.mrf.mxu0
        %v1070 = vadd.f32 0.0, %v1069
        %v1071 = vpop.f32.mrf.mxu0
        %v1072 = vpop.f32.mrf.mxu0
        %v1073 = vadd.f32 0.0, %v1072
        %v1074 = vpop.f32.mrf.mxu0
        %1075 = vdwg.mxu0
        %1076 = vst [vmem:[%s255] sm:$0xff] %v803
        %1077 = vst [vmem:[%s255 + $0x8] sm:$0xff] %v804
        %1078 = vst [vmem:[%s255 + $0x10] sm:$0xff] %v805
        %1079 = vst [vmem:[%s255 + $0x18] sm:$0xff] %v806
        %1080 = vst [vmem:[%s255 + $0x20] sm:$0xff] %v807
        %1081 = vst [vmem:[%s255 + $0x28] sm:$0xff] %v808
        %1082 = vst [vmem:[%s255 + $0x30] sm:$0xff] %v809
        %1083 = vst [vmem:[%s255 + $0x38] sm:$0xff] %v810
        %1084 = vst [vmem:[%s255 + $0x40] sm:$0xff] %v811
        %1085 = vst [vmem:[%s255 + $0x48] sm:$0xff] %v812
        %1086 = vst [vmem:[%s255 + $0x50] sm:$0xff] %v813
        %1087 = vst [vmem:[%s255 + $0x58] sm:$0xff] %v814
        %1088 = vst [vmem:[%s255 + $0x60] sm:$0xff] %v815
        %1089 = vst [vmem:[%s255 + $0x68] sm:$0xff] %v816
        %1090 = vst [vmem:[%s255 + $0x70] sm:$0xff] %v817
        %1091 = vst [vmem:[%s255 + $0x78] sm:$0xff] %v818
        %1092 = vst [vmem:[%s255 + $0x80] sm:$0xff] %v819
        %1093 = vst [vmem:[%s255 + $0x88] sm:$0xff] %v820
        %1094 = vst [vmem:[%s255 + $0x90] sm:$0xff] %v821
        %1095 = vst [vmem:[%s255 + $0x98] sm:$0xff] %v822
        %1096 = vst [vmem:[%s255 + $0xa0] sm:$0xff] %v823
        %1097 = vst [vmem:[%s255 + $0xa8] sm:$0xff] %v824
        %1098 = vst [vmem:[%s255 + $0xb0] sm:$0xff] %v825
        %1099 = vst [vmem:[%s255 + $0xb8] sm:$0xff] %v826
        %1100 = vst [vmem:[%s255 + $0xc0] sm:$0xff] %v827
        %1101 = vst [vmem:[%s255 + $0xc8] sm:$0xff] %v828
        %1102 = vst [vmem:[%s255 + $0xd0] sm:$0xff] %v829
        %1103 = vst [vmem:[%s255 + $0xd8] sm:$0xff] %v830
        %1104 = vst [vmem:[%s255 + $0xe0] sm:$0xff] %v831
        %1105 = vst [vmem:[%s255 + $0xe8] sm:$0xff] %v832
        %1106 = vst [vmem:[%s255 + $0xf0] sm:$0xff] %v833
        %1107 = vst [vmem:[%s255 + $0xf8] sm:$0xff] %v834
        %1108 = vst [vmem:[%s262] sm:$0xff] %v1014
        %1109 = vst [vmem:[%s262 + $0x8] sm:$0xff] %v1017
        %1110 = vst [vmem:[%s262 + $0x10] sm:$0xff] %v1022
        %1111 = vst [vmem:[%s262 + $0x18] sm:$0xff] %v1025
        %1112 = vst [vmem:[%s262 + $0x20] sm:$0xff] %v1030
        %1113 = vst [vmem:[%s262 + $0x28] sm:$0xff] %v1033
        %1114 = vst [vmem:[%s262 + $0x30] sm:$0xff] %v1038
        %1115 = vst [vmem:[%s262 + $0x38] sm:$0xff] %v1041
        %1116 = vst [vmem:[%s262 + $0x40] sm:$0xff] %v1046
        %1117 = vst [vmem:[%s262 + $0x48] sm:$0xff] %v1049
        %1118 = vst [vmem:[%s262 + $0x50] sm:$0xff] %v1054
        %1119 = vst [vmem:[%s262 + $0x58] sm:$0xff] %v1057
        %1120 = vst [vmem:[%s262 + $0x60] sm:$0xff] %v1062
        %1121 = vst [vmem:[%s262 + $0x68] sm:$0xff] %v1065
        %1122 = vst [vmem:[%s262 + $0x70] sm:$0xff] %v1070
        %1123 = vst [vmem:[%s262 + $0x78] sm:$0xff] %v1073
        %s1124 = sand.u32 %s126, 1
        %s1125 = scalar_lea.sflag [#allocation4], %s1124
        %s1126 = sand.u32 %s126, 1
        %s1127 = smul.addr %s1126, 256
        %s1128 = scalar_lea.vmem [#allocation5], %s1127
        %s1129 = sand.u32 %s152, 1
        %s1130 = scalar_lea.sflag [#allocation7], %s1129
        %s1131 = sand.u32 %s152, 1
        %s1132 = smul.addr %s1131, 128
        %s1133 = scalar_lea.vmem [#allocation6], %s1132
        // Predicated region
        $region41: #{tpu_custom_call.1} parent=35 // pred_check
          %p1134 = pneg %p136
        $region42: #{tpu_custom_call.1} parent=35 // pred_check_branch
          %1136 = sbr.rel (%p1134) target = $region44
        $region43: #{tpu_custom_call.1} parent=35 // pred_region
          %s1137 = smul.u32 16, %s24
          %s1139 = ssub.s32 4096, 4096
          %1140 = vsyncadd %s1125, %s1139
          %s1141 = smul.addr %s1137, 2
          %s1142 = smul.addr %s1141, 128
          %s1143 = scalar_lea.hbm %s4, %s1142
          %s1144 = sshll.u32 %s1128, 4
          %s1145 = int_to_ptr.vmem [resolvable:$true] %s1144
          %1150 = dma.vmem_to_hbm [thread:$0]  %s1145, 4096, %s1143, %s1125, 256, 256, 16
        $region44: #{tpu_custom_call.1} parent=35 // pred_fallthru
          _
        // Predicated region
        $region45: #{tpu_custom_call.1} parent=35 // pred_check
          %p1151 = pneg %p162
        $region46: #{tpu_custom_call.1} parent=35 // pred_check_branch
          %1153 = sbr.rel (%p1151) target = $region48
        $region47: #{tpu_custom_call.1} parent=35 // pred_region
          %s1154 = smul.u32 16, %s24
          %s1156 = ssub.s32 2048, 2048
          %1157 = vsyncadd %s1130, %s1156
          %s1158 = smul.addr %s1154, 128
          %s1159 = scalar_lea.hbm %s5, %s1158
          %s1160 = sshll.u32 %s1133, 4
          %s1161 = int_to_ptr.vmem [resolvable:$true] %s1160
          %1166 = dma.vmem_to_hbm [thread:$0]  %s1161, 2048, %s1159, %s1130, 128, 128, 8
        $region48: #{tpu_custom_call.1} parent=35 // pred_fallthru
          _
      $region36: #{tpu_custom_call.1} parent=5 // pred_fallthru
        _
      %p1167 = scmp.le.s32.totalorder 2, %s19
      // Predicated region
      $region49: #{tpu_custom_call.1} parent=5 // pred_check
        %p1168 = pneg %p1167
      $region50: #{tpu_custom_call.1} parent=5 // pred_check_branch
        %1170 = sbr.rel (%p1168) target = $region52
      $region51: #{tpu_custom_call.1} parent=5 // pred_region
        %s1171 = ssub.s32 %s19, 2
        // Predicated region
        $region53: #{tpu_custom_call.1} parent=51 // pred_check
          %p1172 = pneg %p142
        $region54: #{tpu_custom_call.1} parent=51 // pred_check_branch
          %1174 = sbr.rel (%p1172) target = $region56
        $region55: #{tpu_custom_call.1} parent=51 // pred_region
          %s1175 = sand.u32 %s127, 1
          %s1176 = scalar_lea.sflag [#allocation4], %s1175
          %s1177 = sand.u32 %s127, 1
          %s1178 = smul.addr %s1177, 256
          %s1179 = scalar_lea.vmem [#allocation5], %s1178
          %1180 = dma.done %s1176, 4096
        $region56: #{tpu_custom_call.1} parent=51 // pred_fallthru
          _
        // Predicated region
        $region57: #{tpu_custom_call.1} parent=51 // pred_check
          %p1181 = pneg %p168
        $region58: #{tpu_custom_call.1} parent=51 // pred_check_branch
          %1183 = sbr.rel (%p1181) target = $region60
        $region59: #{tpu_custom_call.1} parent=51 // pred_region
          %s1184 = sand.u32 %s153, 1
          %s1185 = scalar_lea.sflag [#allocation7], %s1184
          %s1186 = sand.u32 %s153, 1
          %s1187 = smul.addr %s1186, 128
          %s1188 = scalar_lea.vmem [#allocation6], %s1187
          %1189 = dma.done %s1185, 2048
        $region60: #{tpu_custom_call.1} parent=51 // pred_fallthru
          _
      $region52: #{tpu_custom_call.1} parent=5 // pred_fallthru
        _
    $region6: #{tpu_custom_call.1} parent=1 // loop_footer
      %s23 = sadd.s32 1, %s19
    $region7: #{tpu_custom_call.1} parent=1 // loop_footer_branch
      %18 = sbr.rel target = $region3
    $region8: #{tpu_custom_call.1} parent=1 // loop_exit
      _
    %1190 = vsyncpa [#allocation3], 1
    %s1191 = scalar_lea.sflag [#allocation3], 1
    %1192 = vsyncpa %s1191, 1
    %1193 = vsyncpa [#allocation4], 1
    %s1194 = scalar_lea.sflag [#allocation4], 1
    %1195 = vsyncpa %s1194, 1
    %1196 = vsyncpa [#allocation7], 1
    %s1197 = scalar_lea.sflag [#allocation7], 1
    %1198 = vsyncpa %s1197, 1

</llo_original>
